<compile_context>
chip_gen: v7x
topology: tpu7x:2x2x1
jax: 0.10.0
libtpu: 0.0.40
codegen_flags: <defaults>
</compile_context>

<pallas_src>
import jax
import jax.numpy as jnp
from jax.experimental import pallas as pl
from jax.experimental.pallas import tpu as pltpu

_LANE = 128
_TARGET_BLOCK_BYTES = 4 << 20        # ~4 MiB tiles: amortize per-grid-step overhead
_VMEM_LIMIT_BYTES = 32 << 20         # fits 2x(in+out) 4 MiB buffers on v5e/v6e/v7x
_SMALL_BYTES = 1 << 20               # below this, skip the kernel entirely
_RAGGED_SINGLE_BLOCK_BYTES = 4 << 20  # ragged sizes up to this use one full block


def _copy_kernel(x_ref, o_ref):
    # Elementwise identity on the current VMEM tile.
    o_ref[...] = x_ref[...]


def _sublanes_for(dtype):
    # Native packed sublane count: 8 for 32-bit, 16 for bf16, 32 for int8/fp8.
    return max(8, 32 // jnp.dtype(dtype).itemsize)


def _copy_call(flat, block_shape, grid, semantics, bytes_moved):
    index_map = (lambda i: (i, 0)) if len(block_shape) == 2 else (lambda i: (i,))
    return pl.pallas_call(
        _copy_kernel,
        out_shape=jax.ShapeDtypeStruct(flat.shape, flat.dtype),
        grid_spec=pltpu.PrefetchScalarGridSpec(
            num_scalar_prefetch=0,
            grid=grid,
            in_specs=[pl.BlockSpec(block_shape, index_map)],
            out_specs=pl.BlockSpec(block_shape, index_map),
        ),
        compiler_params=pltpu.CompilerParams(
            dimension_semantics=semantics,
            vmem_limit_bytes=_VMEM_LIMIT_BYTES,
        ),
        cost_estimate=pl.CostEstimate(
            flops=0, transcendentals=0, bytes_accessed=bytes_moved),
    )(flat)


def identity_copy(x):
    """Stream `x` through a Pallas copy kernel (1 HBM read + 1 HBM write)."""
    orig_shape = x.shape
    dtype = x.dtype
    itemsize = jnp.dtype(dtype).itemsize
    n = x.size
    if n == 0:
        return x

    sub = _sublanes_for(dtype)
    bytes_moved = 2 * n * itemsize
    flat = x.reshape(-1)

    if n % _LANE == 0:
        # Lane-dense 2D slab, no padding: Pallas clips the last partial block
        # of rows, so any multiple of 128 stays at the 2n-byte floor.
        wide = _LANE
        for w in (1024, 512, 256, 128):
            if n % w == 0 and n // w >= sub:
                wide = w
                break
        rows = n // wide

        # ~4 MiB blocks, rounded to the sublane packing.
        block_rows = max(sub, (_TARGET_BLOCK_BYTES // (wide * itemsize)) // sub * sub)
        # Guarantee >= 2 blocks when possible so ("parallel",) can shard the
        # grid across both TensorCores on v7x.
        if rows >= 2 * sub:
            half = pl.cdiv(pl.cdiv(rows, 2), sub) * sub
            block_rows = min(block_rows, half)
        block_rows = min(block_rows, rows)
        num_blocks = pl.cdiv(rows, block_rows)

        out = _copy_call(flat.reshape(rows, wide), (block_rows, wide),
                         (num_blocks,), ("parallel",), bytes_moved)
        return out.reshape(orig_shape)

    if n * itemsize <= _RAGGED_SINGLE_BLOCK_BYTES:
        # Ragged length (not a multiple of 128): single full-extent 1D block.
        # No jnp.pad / trailing slice, so traffic stays at the 2n-byte floor.
        out = _copy_call(flat, (n,), (1,), ("arbitrary",), bytes_moved)
        return out.reshape(orig_shape)

    # Huge-and-ragged corner case (rarely hit): pad + 2D copy + slice.
    # TODO(synk): replace with clipped 1D chunking (no pad) once partial
    # lane-dim blocks are validated on all generations.
    min_tile = sub * _LANE
    padded = pl.cdiv(n, min_tile) * min_tile
    flat = jnp.pad(flat, (0, padded - n))
    rows = padded // _LANE
    block_rows = max(sub, (_TARGET_BLOCK_BYTES // (_LANE * itemsize)) // sub * sub)
    block_rows = min(block_rows, rows)
    num_blocks = pl.cdiv(rows, block_rows)
    out = _copy_call(flat.reshape(rows, _LANE), (block_rows, _LANE),
                     (num_blocks,), ("parallel",), 2 * padded * itemsize)
    return out.reshape(-1)[:n].reshape(orig_shape)


class Identity:
    """JAX/Pallas port of the PyTorch Identity module.

    The PyTorch forward returns the selected input tensor itself (zero data
    movement), so the selected array is returned directly whenever a fresh
    HBM copy would be pure overhead.  Larger tensors are streamed through the
    Pallas copy kernel when `use_kernel=True` (default).
    """

    def __init__(self, n, *, use_kernel=True):
        self.n = n
        self.use_kernel = use_kernel

    def __call__(self, x0, x1, x2, rel):
        # `n` is static (constructor arg), so the branch resolves in Python,
        # exactly mirroring the PyTorch forward.  `rel` is unused.
        if self.n == 0:
            x = x0
        elif self.n == 1:
            x = x1
        else:
            x = x2
        if not self.use_kernel:
            return x
        # Tiny inputs: launch + single-grid-step overhead dwarfs the copy, and
        # Identity semantics do not require a copy at all (review opts #1/#2).
        if x.size * jnp.dtype(x.dtype).itemsize < _SMALL_BYTES:
            return x
        return identity_copy(x)


if __name__ == "__main__":
    key = jax.random.PRNGKey(0)
    k0, k1, k2, k3 = jax.random.split(key, 4)

    # Small NCHW-shaped inputs consistent with a conv-style module.
    x0 = jax.random.normal(k0, (2, 4, 16, 16), dtype=jnp.float32)
    x1 = jax.random.normal(k1, (2, 4, 16, 16), dtype=jnp.float32)
    x2 = jax.random.normal(k2, (2, 4, 16, 16), dtype=jnp.float32)
    rel = jax.random.normal(k3, (2, 4, 16, 16), dtype=jnp.float32)

    ok = True

    # Module semantics (tiny tensors take the zero-copy fast path).
    for n_sel, expected in ((0, x0), (1, x1), (2, x2)):
        out = jax.block_until_ready(Identity(n_sel)(x0, x1, x2, rel))
        ok &= out.shape == expected.shape and out.dtype == expected.dtype
        ok &= bool(jnp.array_equal(out, expected))

    # Pallas kernel path (lane-dense 2D slab), run + validated explicitly.
    out_k = jax.block_until_ready(identity_copy(x0))
    ok &= out_k.shape == x0.shape and out_k.dtype == x0.dtype
    ok &= bool(jnp.array_equal(out_k, x0))

    # Ragged length (210 elements): single full-extent block, no pad/slice.
    xr = jax.random.normal(k0, (2, 3, 5, 7), dtype=jnp.float32)
    out_r = jax.block_until_ready(identity_copy(xr))
    ok &= out_r.shape == xr.shape and bool(jnp.array_equal(out_r, xr))

    # Packed dtype path (bf16 -> 16 sublanes).
    xb = jax.random.normal(k1, (2, 4, 16, 16), dtype=jnp.float32).astype(jnp.bfloat16)
    out_b = jax.block_until_ready(identity_copy(xb))
    ok &= out_b.dtype == jnp.bfloat16 and bool(jnp.array_equal(out_b, xb))

    if ok:
        print("KERNEL_OK")
</pallas_src>

<mosaic_0001>
module attributes {stable_mosaic.version = 11 : i64} {
  func.func @_copy_kernel(%arg0: i32, %arg1: memref<8x256xf32, #tpu.memory_space<vmem>>, %arg2: memref<8x256xf32, #tpu.memory_space<vmem>>) attributes {dimension_semantics = [#tpu.dimension_semantics<parallel>], iteration_bounds = array<i64: 1>, scalar_prefetch = 0 : i64, scratch_operands = 0 : i64, tpu.core_type = #tpu.core_type<tc>, window_params = [{transform_indices = @transform_0, window_bounds = array<i64: 8, 256>}, {transform_indices = @transform_1, window_bounds = array<i64: 8, 256>}]} {
    %c0 = arith.constant 0 : index
    %c0_0 = arith.constant 0 : index
    %0 = vector.load %arg1[%c0, %c0_0] : memref<8x256xf32, #tpu.memory_space<vmem>>, vector<8x256xf32>
    %c0_1 = arith.constant 0 : index
    %c0_2 = arith.constant 0 : index
    %1 = vector.load %arg2[%c0_1, %c0_2] : memref<8x256xf32, #tpu.memory_space<vmem>>, vector<8x256xf32>
    tpu.vector_store %arg2[%c0_1, %c0_2], %0 {strides = array<i32>} : memref<8x256xf32, #tpu.memory_space<vmem>>, vector<8x256xf32>,
    return
  }
  func.func @transform_0(%arg0: i32) -> (i32, i32) {
    %c0_i32 = arith.constant 0 : i32
    %c0_i32_0 = arith.constant 0 : i32
    return %arg0, %c0_i32 : i32, i32
  }
  func.func @transform_1(%arg0: i32) -> (i32, i32) {
    %c0_i32 = arith.constant 0 : i32
    %c0_i32_0 = arith.constant 0 : i32
    return %arg0, %c0_i32 : i32, i32
  }
}

</mosaic_0001>

<llo_original>
// kernel: tpu_custom_call.1
$region0: #{tpu_custom_call.1}
  #allocation0 [shape = 'u32[]', space=smem, size = 0x4, offset = 0x4, fixed_abs, tag = 'smem constant byte address 0x4 - core index']
  #allocation1 [shape = 'u32[144,128]{1,0:T(1,128)}', space=vmem, size = 0x12000, scoped, tag = 'internal scratch']
  %s0 = inlined_call_operand.hbm [shape: f32[8,256], index: 0, kind: input, shape index: {}]
  %s1 = inlined_call_operand.hbm [shape: f32[8,256], index: 1, kind: output, shape index: {}]
  %s2 = sld [smem:[#allocation0]]
  $region18: #{tpu_custom_call.1} parent=0
    _
  %s4 = ssub.s32 1, %s2
  %s5 = scalar_select 0, %s4, %s2
  $region1: #{tpu_custom_call.1} parent=0
    #allocation2 [shape = 'u8[8192]{0}', space=vmem, size = 0x2000, scoped, tag = 'input window, operand 0, single buffered']
    #allocation3 [shape = 's32[1]{0}', space=sflag, size = 0x4, scoped, tag = 'scoped memory for tpu_custom_call.1']
    #allocation4 [shape = 's32[1]{0}', space=sflag, size = 0x4, scoped, tag = 'scoped memory for tpu_custom_call.1']
    #allocation5 [shape = 'u8[8192]{0}', space=vmem, size = 0x2000, scoped, tag = 'output window, operand 0, single buffered']
    %6 = vsyncpa [#allocation3], 0
    %7 = vsyncpa [#allocation4], 0
    // Predicated region
    $region2: #{tpu_custom_call.1} parent=1 // pred_check
      _
    $region3: #{tpu_custom_call.1} parent=1 // pred_check_branch
      %9 = sbr.rel (0) target = $region5
    $region4: #{tpu_custom_call.1} parent=1 // pred_region
      %s11 = ssub.s32 256, 256
      %12 = vsyncadd [#allocation3], %s11
      %s14 = sshll.u32 [#allocation2], 4
      %s15 = int_to_ptr.vmem [resolvable:$true] %s14
      %17 = dma.hbm_to_vmem [thread:$0]  %s0, 256, %s15, [#allocation3]
    $region5: #{tpu_custom_call.1} parent=1 // pred_fallthru
      _
    // Predicated region
    $region6: #{tpu_custom_call.1} parent=1 // pred_check
      _
    $region7: #{tpu_custom_call.1} parent=1 // pred_check_branch
      %19 = sbr.rel (0) target = $region9
    $region8: #{tpu_custom_call.1} parent=1 // pred_region
      %20 = dma.done [#allocation3], 256
    $region9: #{tpu_custom_call.1} parent=1 // pred_fallthru
      _
    %v21 = vld [vmem:[#allocation2] sm:$0xff]
    %v22 = vld [vmem:[#allocation2 + $0x8] sm:$0xff]
    %23 = vst [vmem:[#allocation5] sm:$0xff] %v21
    %24 = vst [vmem:[#allocation5 + $0x8] sm:$0xff] %v22
    // Predicated region
    $region10: #{tpu_custom_call.1} parent=1 // pred_check
      _
    $region11: #{tpu_custom_call.1} parent=1 // pred_check_branch
      %26 = sbr.rel (0) target = $region13
    $region12: #{tpu_custom_call.1} parent=1 // pred_region
      %s28 = ssub.s32 256, 256
      %29 = vsyncadd [#allocation4], %s28
      %s31 = sshll.u32 [#allocation5], 4
      %s32 = int_to_ptr.vmem [resolvable:$true] %s31
      %34 = dma.vmem_to_hbm [thread:$0]  %s32, 256, %s1, [#allocation4]
    $region13: #{tpu_custom_call.1} parent=1 // pred_fallthru
      _
    // Predicated region
    $region14: #{tpu_custom_call.1} parent=1 // pred_check
      _
    $region15: #{tpu_custom_call.1} parent=1 // pred_check_branch
      %36 = sbr.rel (0) target = $region17
    $region16: #{tpu_custom_call.1} parent=1 // pred_region
      %37 = dma.done [#allocation4], 256
    $region17: #{tpu_custom_call.1} parent=1 // pred_fallthru
      _
    %38 = vsyncpa [#allocation3], 1
    %39 = vsyncpa [#allocation4], 1

</llo_original>
